<compile_context>
chip_gen: v7x
topology: tpu7x:2x2x1
jax: 0.10.0
libtpu: 0.0.40
codegen_flags: <defaults>
</compile_context>

<pallas_src>
import jax
import jax.numpy as jnp
from jax.experimental import pallas as pl
from jax.experimental.pallas import tpu as pltpu
from functools import partial


def _neg_scale_kernel(neg_coeff_ref, g_ref, o_ref):
    # Backward hot path: grad_in = (-coeff) * grad_out, -coeff read from SMEM.
    o_ref[...] = (g_ref[...] * neg_coeff_ref[0, 0]).astype(o_ref.dtype)


def _pick_lane(n):
    """Largest lane width (multiple of 128) dividing n, preferring >= 8 rows."""
    candidates = (2048, 1024, 512, 256, 128)
    fallback = None
    for cand in candidates:
        if n % cand == 0:
            if fallback is None:
                fallback = cand
            if n // cand >= 8:
                return cand
    return fallback


def _largest_divisor_leq(n, cap):
    for d in range(min(n, cap), 0, -1):
        if n % d == 0:
            return d
    return 1


def _reverse_scale_grad(g, coeff):
    """Compute -coeff * g with a tiled, lane-dense Pallas kernel."""
    orig_shape = g.shape
    n = g.size
    neg_coeff_arr = jnp.asarray(-coeff, dtype=jnp.float32).reshape(1, 1)

    lane = _pick_lane(n)

    if lane is None:
        # TODO(synk): sizes not divisible by 128 fall back to a single
        # full-array block (still correct; tail lanes use masked stores).
        cols = _largest_divisor_leq(n, 2048)
        flat = g.reshape(n // cols, cols)
        out = pl.pallas_call(
            _neg_scale_kernel,
            out_shape=jax.ShapeDtypeStruct(flat.shape, flat.dtype),
            in_specs=[
                pl.BlockSpec(memory_space=pltpu.MemorySpace.SMEM),
                pl.BlockSpec(flat.shape, lambda: (0, 0)),
            ],
            out_specs=pl.BlockSpec(flat.shape, lambda: (0, 0)),
            input_output_aliases={1: 0},
        )(neg_coeff_arr, flat)
        return out.reshape(orig_shape)

    rows = n // lane
    flat = g.reshape(rows, lane)

    # ~2 MiB per block: double-buffered in + out (4 buffers) stays well under
    # the scoped-VMEM defaults on all current chips; measured mem-bound kernels
    # are already ~85% of HBM roofline at this block size.
    max_block_bytes = 2 * 1024 * 1024
    bytes_per_row = lane * flat.dtype.itemsize
    tile_rows = min(rows, max(1, max_block_bytes // bytes_per_row))
    if tile_rows < rows:
        tile_rows = max(8, (tile_rows // 8) * 8)  # keep sublane dim a multiple of 8
    grid = (pl.cdiv(rows, tile_rows),)

    out = pl.pallas_call(
        _neg_scale_kernel,
        out_shape=jax.ShapeDtypeStruct((rows, lane), flat.dtype),
        grid=grid,
        in_specs=[
            pl.BlockSpec(memory_space=pltpu.MemorySpace.SMEM),     # -coeff scalar
            pl.BlockSpec((tile_rows, lane), lambda i: (i, 0)),     # grad tiles
        ],
        out_specs=pl.BlockSpec((tile_rows, lane), lambda i: (i, 0)),
        input_output_aliases={1: 0},  # write result into the grad buffer
        compiler_params=pltpu.CompilerParams(
            dimension_semantics=("parallel",)),
    )(neg_coeff_arr, flat)
    return out.reshape(orig_shape)


@partial(jax.custom_vjp, nondiff_argnums=(1,))
def gradient_reverse_layer(x, coeff=1.0):
    """Forward: identity (no copy). Backward: -coeff * grad via Pallas kernel."""
    return x


def _grl_fwd(x, coeff):
    return x, None


def _grl_bwd(coeff, _, g):
    return (_reverse_scale_grad(g, coeff),)


gradient_reverse_layer.defvjp(_grl_fwd, _grl_bwd)


if __name__ == "__main__":
    key = jax.random.PRNGKey(0)
    # NCHW input, as the PyTorch module would typically see.
    x = jax.random.normal(key, (2, 4, 16, 16), dtype=jnp.float32)

    # Forward: pure identity passthrough (no kernel, no HBM copy).
    y = jax.block_until_ready(gradient_reverse_layer(x, 1.0))
    assert y.shape == x.shape and y.dtype == x.dtype
    assert jnp.allclose(y, x), "forward must be identity"

    # Backward: Pallas kernel computes -coeff * grad.
    coeff = 0.5
    grads = jax.grad(lambda t: jnp.sum(gradient_reverse_layer(t, coeff)))(x)
    grads = jax.block_until_ready(grads)
    assert jnp.allclose(grads, -coeff * jnp.ones_like(x)), "backward must be -coeff * g"

    # Exercise the multi-tile grid path of the backward kernel directly.
    g_big = jax.random.normal(jax.random.PRNGKey(1), (64, 16, 32, 32), dtype=jnp.float32)
    r = jax.block_until_ready(_reverse_scale_grad(g_big, 2.0))
    assert r.shape == g_big.shape and r.dtype == g_big.dtype
    assert jnp.allclose(r, -2.0 * g_big), "tiled backward kernel mismatch"

    # Exercise bf16 gradients (dtype must be preserved; coeff=2.0 is exact).
    g_bf16 = jax.random.normal(jax.random.PRNGKey(2), (4, 8, 128), dtype=jnp.bfloat16)
    r_bf16 = jax.block_until_ready(_reverse_scale_grad(g_bf16, 2.0))
    assert r_bf16.dtype == jnp.bfloat16
    assert jnp.allclose(r_bf16.astype(jnp.float32), -2.0 * g_bf16.astype(jnp.float32)), \
        "bf16 backward kernel mismatch"

    # Exercise the non-128-divisible fallback path.
    g_odd = jax.random.normal(jax.random.PRNGKey(3), (3, 5, 7), dtype=jnp.float32)
    r_odd = jax.block_until_ready(_reverse_scale_grad(g_odd, 1.5))
    assert jnp.allclose(r_odd, -1.5 * g_odd), "fallback backward kernel mismatch"

    print("KERNEL_OK")
</pallas_src>

<mosaic_0001>
module attributes {stable_mosaic.version = 11 : i64} {
  func.func @_neg_scale_kernel(%arg0: i32, %arg1: memref<1x1xf32, #tpu.memory_space<smem>>, %arg2: memref<8x256xf32, #tpu.memory_space<vmem>>, %arg3: memref<8x256xf32, #tpu.memory_space<vmem>>) attributes {dimension_semantics = [#tpu.dimension_semantics<parallel>], iteration_bounds = array<i64: 1>, scalar_prefetch = 0 : i64, scratch_operands = 0 : i64, tpu.core_type = #tpu.core_type<tc>, window_params = [{transform_indices = @transform_0, window_bounds = array<i64: 1, 1>}, {transform_indices = @transform_1, window_bounds = array<i64: 8, 256>}, {transform_indices = @transform_2, window_bounds = array<i64: 8, 256>}]} {
    %c0 = arith.constant 0 : index
    %c0_0 = arith.constant 0 : index
    %0 = vector.load %arg2[%c0, %c0_0] : memref<8x256xf32, #tpu.memory_space<vmem>>, vector<8x256xf32>
    %c0_1 = arith.constant 0 : index
    %c0_2 = arith.constant 0 : index
    %1 = memref.load %arg1[%c0_1, %c0_2] : memref<1x1xf32, #tpu.memory_space<smem>>
    %2 = vector.broadcast %1 : f32 to vector<8x256xf32>
    %3 = arith.mulf %0, %2 : vector<8x256xf32>
    %c0_3 = arith.constant 0 : index
    %c0_4 = arith.constant 0 : index
    %4 = vector.load %arg3[%c0_3, %c0_4] : memref<8x256xf32, #tpu.memory_space<vmem>>, vector<8x256xf32>
    tpu.vector_store %arg3[%c0_3, %c0_4], %3 {strides = array<i32>} : memref<8x256xf32, #tpu.memory_space<vmem>>, vector<8x256xf32>,
    return
  }
  func.func @transform_0(%arg0: i32) -> (i32, i32) {
    %c0_i32 = arith.constant 0 : i32
    %c0_i32_0 = arith.constant 0 : i32
    %c0_i32_1 = arith.constant 0 : i32
    return %c0_i32, %c0_i32_0 : i32, i32
  }
  func.func @transform_1(%arg0: i32) -> (i32, i32) {
    %c0_i32 = arith.constant 0 : i32
    %c0_i32_0 = arith.constant 0 : i32
    return %arg0, %c0_i32 : i32, i32
  }
  func.func @transform_2(%arg0: i32) -> (i32, i32) {
    %c0_i32 = arith.constant 0 : i32
    %c0_i32_0 = arith.constant 0 : i32
    return %arg0, %c0_i32 : i32, i32
  }
}

</mosaic_0001>

<llo_original>
// kernel: tpu_custom_call.1
$region0: #{tpu_custom_call.1}
  #allocation0 [shape = 'u32[]', space=smem, size = 0x4, offset = 0x4, fixed_abs, tag = 'smem constant byte address 0x4 - core index']
  #allocation1 [shape = 'u32[144,128]{1,0:T(1,128)}', space=vmem, size = 0x12000, scoped, tag = 'internal scratch']
  #allocation2 [shape = 'f32[1,1]{1,0:T(1,128)S(6)}', space=smem, size = 0x200, scoped, tag = 'scoped memory for tpu_custom_call.1']
  %s0 = inlined_call_operand.<no memory space> [shape: f32[1,1], index: 0, kind: input, shape index: {}]
  %s1 = inlined_call_operand.hbm [shape: f32[8,256], index: 1, kind: input, shape index: {}, may-alias: {1,2}]
  %s2 = inlined_call_operand.hbm [shape: f32[8,256], index: 2, kind: output, shape index: {}, may-alias: {1,2}]
  %s3 = sld [smem:[#allocation0]]
  $region22: #{tpu_custom_call.1} parent=0
    _
  %s5 = ssub.s32 1, %s3
  %s6 = scalar_select 0, %s5, %s3
  %7 = sst [smem:[#allocation2]] %s0
  $region1: #{tpu_custom_call.1} parent=0
    #allocation3 [shape = 'u8[8192]{0}', space=vmem, size = 0x2000, scoped, tag = 'input window, operand 1, single buffered']
    #allocation4 [shape = 's32[1]{0}', space=sflag, size = 0x4, scoped, tag = 'scoped memory for tpu_custom_call.1']
    #allocation5 [shape = 's32[1]{0}', space=sflag, size = 0x4, scoped, tag = 'scoped memory for tpu_custom_call.1']
    #allocation6 [shape = 'u8[8192]{0}', space=vmem, size = 0x2000, scoped, tag = 'output window, operand 0, single buffered']
    %8 = vsyncpa [#allocation4], 0
    %9 = vsyncpa [#allocation5], 0
    // Predicated region
    $region2: #{tpu_custom_call.1} parent=1 // pred_check
      _
    $region3: #{tpu_custom_call.1} parent=1 // pred_check_branch
      %11 = sbr.rel (0) target = $region5
    $region4: #{tpu_custom_call.1} parent=1 // pred_region
      _
    $region5: #{tpu_custom_call.1} parent=1 // pred_fallthru
      _
    // Predicated region
    $region6: #{tpu_custom_call.1} parent=1 // pred_check
      _
    $region7: #{tpu_custom_call.1} parent=1 // pred_check_branch
      %13 = sbr.rel (0) target = $region9
    $region8: #{tpu_custom_call.1} parent=1 // pred_region
      %s15 = ssub.s32 256, 256
      %16 = vsyncadd [#allocation4], %s15
      %s18 = sshll.u32 [#allocation3], 4
      %s19 = int_to_ptr.vmem [resolvable:$true] %s18
      %21 = dma.hbm_to_vmem [thread:$0]  %s1, 256, %s19, [#allocation4]
    $region9: #{tpu_custom_call.1} parent=1 // pred_fallthru
      _
    // Predicated region
    $region10: #{tpu_custom_call.1} parent=1 // pred_check
      _
    $region11: #{tpu_custom_call.1} parent=1 // pred_check_branch
      %23 = sbr.rel (0) target = $region13
    $region12: #{tpu_custom_call.1} parent=1 // pred_region
      %24 = dma.done [#allocation4], 256
    $region13: #{tpu_custom_call.1} parent=1 // pred_fallthru
      _
    %v25 = vld [vmem:[#allocation3] sm:$0xff]
    %v26 = vld [vmem:[#allocation3 + $0x8] sm:$0xff]
    %s27 = sld [smem:[#allocation2]]
    %v28 = vstv %s27
    %v29 = vmul.f32 %v25, %v28
    %v30 = vmul.f32 %v26, %v28
    %31 = vst [vmem:[#allocation6] sm:$0xff] %v29
    %32 = vst [vmem:[#allocation6 + $0x8] sm:$0xff] %v30
    // Predicated region
    $region14: #{tpu_custom_call.1} parent=1 // pred_check
      _
    $region15: #{tpu_custom_call.1} parent=1 // pred_check_branch
      %34 = sbr.rel (0) target = $region17
    $region16: #{tpu_custom_call.1} parent=1 // pred_region
      %s36 = ssub.s32 256, 256
      %37 = vsyncadd [#allocation5], %s36
      %s39 = sshll.u32 [#allocation6], 4
      %s40 = int_to_ptr.vmem [resolvable:$true] %s39
      %42 = dma.vmem_to_hbm [thread:$0]  %s40, 256, %s2, [#allocation5]
    $region17: #{tpu_custom_call.1} parent=1 // pred_fallthru
      _
    // Predicated region
    $region18: #{tpu_custom_call.1} parent=1 // pred_check
      _
    $region19: #{tpu_custom_call.1} parent=1 // pred_check_branch
      %44 = sbr.rel (0) target = $region21
    $region20: #{tpu_custom_call.1} parent=1 // pred_region
      %45 = dma.done [#allocation5], 256
    $region21: #{tpu_custom_call.1} parent=1 // pred_fallthru
      _
    %46 = vsyncpa [#allocation4], 1
    %47 = vsyncpa [#allocation5], 1

</llo_original>
